<compile_context>
chip_gen: v7x
topology: tpu7x:2x2x1
jax: 0.10.0
libtpu: 0.0.40
codegen_flags: <defaults>
</compile_context>

<pallas_src>
import jax
import jax.numpy as jnp
import numpy as np
from jax import lax
from jax.experimental import pallas as pl
from jax.experimental.pallas import tpu as pltpu

# ------------------------------- sizes -------------------------------
# Small demo shapes; scale B (and TB toward 128+) in production to fill MXU rows.
B = 16         # batch of observations (2 tiles -> exercises the parallel grid axis)
TB = 8         # batch tile per grid step (multiple of 8 sublanes)
OBS = 16       # observation dim
REP = 128      # representation state dim (lane aligned)
H1 = 128       # actor hidden 1
H2 = 128       # actor hidden 2
ACT = 4        # action_space.n
LANE = 128
IN_W = 32              # packed input: cols 0:OBS = obs, OBS:OBS+ACT = uniforms, rest 0
OUT_W = 3 * LANE       # packed output: [state | padded logits | action (f32-encoded)]

# static row offsets in the packed bf16 weight slab (multiples of 16 -> bf16 tile aligned)
_OFF_REP = 0
_OFF_A1 = _OFF_REP + OBS        # 16
_OFF_A2 = _OFF_A1 + REP         # 144
_OFF_OUT = _OFF_A2 + H1         # 272
_ROWS = _OFF_OUT + H2           # 400


# ------------------------------ kernel ------------------------------
def _sacdis_forward_kernel(xin_ref, w_ref, b_ref, out_ref):
    f32, bf16 = jnp.float32, jnp.bfloat16

    def dot(x, w_slice):
        # bf16 x bf16 -> f32 accumulation on the MXU (single pass on all generations)
        return jnp.dot(x.astype(bf16), w_slice, preferred_element_type=f32)

    relu = lambda x: jnp.maximum(x, 0.0)

    xin = xin_ref[...]                       # (TB, IN_W) f32   (one small DMA)
    obs = xin[:, :OBS]                       # (TB, OBS)
    u = xin[:, OBS:OBS + ACT]                # (TB, ACT) uniforms for Gumbel-max
    b = b_ref[...]                           # (4, LANE) f32 bias slab (1 vreg)

    # --- actor representation (Basic_MLP): Linear + ReLU ---
    state = relu(dot(obs, w_ref[_OFF_REP:_OFF_A1, :]) + b[0:1, :])       # (TB, REP)

    # --- actor MLP (ActorNet_SAC): 2x(Linear+ReLU) -> output Linear -> logits ---
    h = relu(dot(state, w_ref[_OFF_A1:_OFF_A2, :]) + b[1:2, :])          # (TB, H1)
    h = relu(dot(h, w_ref[_OFF_A2:_OFF_OUT, :]) + b[2:3, :])             # (TB, H2)
    logits_pad = dot(h, w_ref[_OFF_OUT:_ROWS, :]) + b[3:4, :]            # (TB, LANE); cols>=ACT are exactly 0

    # --- stochastic_sample(): Categorical(logits).sample() via Gumbel-max ---
    # TODO(synk): torch's Categorical.sample() uses inverse-CDF on torch's RNG stream;
    # Gumbel-max with host-supplied uniforms is distributionally identical.
    u = jnp.minimum(jnp.maximum(u, 1e-12), 1.0 - 1e-7)   # guard against exact 0 / 1
    z = logits_pad[:, :ACT] + (-jnp.log(-jnp.log(u)))    # (TB, ACT) f32; padding lanes excluded
    m = jnp.max(z, axis=-1, keepdims=True)
    idx = lax.broadcasted_iota(jnp.int32, z.shape, 1)
    act = jnp.min(jnp.where(z == m, idx, ACT), axis=-1, keepdims=True)   # (TB, 1) int32

    # action values (0..ACT-1) are exact in f32; broadcast lane-dense for an unmasked store
    act_col = jnp.broadcast_to(act.astype(f32), (TB, LANE))

    # single lane-dense (TB, 384) store -> exactly one output DMA per tile, no vst.msk
    out_ref[...] = jnp.concatenate([state, logits_pad, act_col], axis=-1)


# ------------------------------ wrapper ------------------------------
def sacdis_forward(xin, w_slab, b_slab):
    out = pl.pallas_call(
        _sacdis_forward_kernel,
        out_shape=jax.ShapeDtypeStruct((B, OUT_W), jnp.float32),
        grid_spec=pltpu.PrefetchScalarGridSpec(
            num_scalar_prefetch=0,
            grid=(B // TB,),
            in_specs=[
                pl.BlockSpec((TB, IN_W), lambda i: (i, 0)),       # packed obs|uniforms tile
                pl.BlockSpec((_ROWS, LANE), lambda i: (0, 0)),    # weight slab, VMEM-resident
                pl.BlockSpec((4, LANE), lambda i: (0, 0)),        # bias slab, VMEM-resident
            ],
            out_specs=pl.BlockSpec((TB, OUT_W), lambda i: (i, 0)),
        ),
        compiler_params=pltpu.CompilerParams(
            dimension_semantics=("parallel",)),    # batch tiles across TCs on v7x
    )(xin, w_slab, b_slab)

    state = out[:, :REP]                           # outputs['state']
    logits = out[:, LANE:LANE + ACT]               # act_dist logits
    act = out[:, 2 * LANE].astype(jnp.int32)       # act_samples, shape (B,)
    return state, logits, act


# ------------------------ deterministic parameters ------------------------
def make_params(key):
    ks = jax.random.split(key, 4)

    def lin(k, fin, fout):
        kw, kb = jax.random.split(k)
        bound = 1.0 / np.sqrt(fin)
        w = jax.random.uniform(kw, (fin, fout), jnp.float32, -bound, bound)
        b = jax.random.uniform(kb, (fout,), jnp.float32, -bound, bound)
        return w, b

    w_rep, b_rep = lin(ks[0], OBS, REP)
    w_a1, b_a1 = lin(ks[1], REP, H1)
    w_a2, b_a2 = lin(ks[2], H1, H2)
    w_out, b_out = lin(ks[3], H2, ACT)

    # pad the output layer to the 128-lane slab width (extra columns give logit == 0,
    # and are excluded from sampling in-kernel / sliced off in the wrapper)
    w_out_p = jnp.zeros((H2, LANE), jnp.float32).at[:, :ACT].set(w_out)
    b_out_p = jnp.zeros((LANE,), jnp.float32).at[:ACT].set(b_out)

    w_slab = jnp.concatenate([w_rep, w_a1, w_a2, w_out_p], axis=0).astype(jnp.bfloat16)
    b_slab = jnp.stack([b_rep, b_a1, b_a2, b_out_p], axis=0)   # (4, 128) f32
    return w_slab, b_slab


# ----------------------------- pure-JAX reference -----------------------------
def reference_forward(obs, w_slab, b_slab):
    def dot(x, w):
        return jnp.dot(x.astype(jnp.bfloat16), w, preferred_element_type=jnp.float32)

    relu = lambda x: jnp.maximum(x, 0.0)
    b = b_slab
    state = relu(dot(obs, w_slab[_OFF_REP:_OFF_A1]) + b[0:1])
    h = relu(dot(state, w_slab[_OFF_A1:_OFF_A2]) + b[1:2])
    h = relu(dot(h, w_slab[_OFF_A2:_OFF_OUT]) + b[2:3])
    logits = (dot(h, w_slab[_OFF_OUT:_ROWS]) + b[3:4])[:, :ACT]
    return state, logits


# ------------------------------------ main ------------------------------------
if __name__ == "__main__":
    root = jax.random.PRNGKey(0)
    kp, ko, ku = jax.random.split(root, 3)

    w_slab, b_slab = make_params(kp)
    obs = jax.random.normal(ko, (B, OBS), jnp.float32)
    # uniforms for the Gumbel-max categorical sampling (strictly inside (0, 1))
    u = jax.random.uniform(ku, (B, ACT), jnp.float32, 1e-6, 1.0 - 1e-6)

    # pack obs and uniforms into one small input array (3 input DMAs total)
    xin = (jnp.zeros((B, IN_W), jnp.float32)
           .at[:, :OBS].set(obs)
           .at[:, OBS:OBS + ACT].set(u))

    state, logits, act = jax.block_until_ready(sacdis_forward(xin, w_slab, b_slab))

    state_ref, logits_ref = reference_forward(obs, w_slab, b_slab)
    np.testing.assert_allclose(np.asarray(state), np.asarray(state_ref), rtol=1e-2, atol=1e-2)
    np.testing.assert_allclose(np.asarray(logits), np.asarray(logits_ref), rtol=1e-2, atol=1e-2)

    # sampled actions must equal Gumbel-max over the (kernel) logits with the same uniforms
    z = np.asarray(logits) + (-np.log(-np.log(np.asarray(u))))
    np.testing.assert_array_equal(np.asarray(act), np.argmax(z, axis=-1))

    print("KERNEL_OK")
</pallas_src>

<mosaic_0001>
module attributes {stable_mosaic.version = 11 : i64} {
  func.func @_sacdis_forward_kernel(%arg0: i32, %arg1: memref<8x32xf32, #tpu.memory_space<vmem>>, %arg2: memref<400x128xbf16, #tpu.memory_space<vmem>>, %arg3: memref<4x128xf32, #tpu.memory_space<vmem>>, %arg4: memref<8x384xf32, #tpu.memory_space<vmem>>) attributes {dimension_semantics = [#tpu.dimension_semantics<parallel>], iteration_bounds = array<i64: 2>, scalar_prefetch = 0 : i64, scratch_operands = 0 : i64, tpu.core_type = #tpu.core_type<tc>, window_params = [{transform_indices = @transform_0, window_bounds = array<i64: 8, 32>}, {pipeline_mode = #tpu.pipeline_mode<synchronous>, transform_indices = @transform_1, window_bounds = array<i64: 400, 128>}, {pipeline_mode = #tpu.pipeline_mode<synchronous>, transform_indices = @transform_2, window_bounds = array<i64: 4, 128>}, {transform_indices = @transform_3, window_bounds = array<i64: 8, 384>}]} {
    %c0 = arith.constant 0 : index
    %c0_0 = arith.constant 0 : index
    %0 = vector.load %arg1[%c0, %c0_0] : memref<8x32xf32, #tpu.memory_space<vmem>>, vector<8x32xf32>
    %1 = vector.extract_strided_slice %0 {offsets = [0, 0], sizes = [8, 16], strides = [1, 1]} : vector<8x32xf32> to vector<8x16xf32>
    %2 = vector.extract_strided_slice %0 {offsets = [0, 16], sizes = [8, 4], strides = [1, 1]} : vector<8x32xf32> to vector<8x4xf32>
    %c0_1 = arith.constant 0 : index
    %c0_2 = arith.constant 0 : index
    %3 = vector.load %arg3[%c0_1, %c0_2] : memref<4x128xf32, #tpu.memory_space<vmem>>, vector<4x128xf32>
    %c0_3 = arith.constant 0 : index
    %c0_4 = arith.constant 0 : index
    %4 = vector.load %arg2[%c0_3, %c0_4] : memref<400x128xbf16, #tpu.memory_space<vmem>>, vector<16x128xbf16>
    %5 = arith.truncf %1 : vector<8x16xf32> to vector<8x16xbf16>
    %cst = arith.constant dense<0.000000e+00> : vector<8x128xf32>
    %6 = tpu.matmul %5, %4, %cst {dimension_numbers = #tpu.dot_dimension_numbers<[1], [0], [0], [1], [0, 0, 1, 1], [], []>} : vector<8x16xbf16>, vector<16x128xbf16>, vector<8x128xf32> -> vector<8x128xf32>
    %7 = vector.extract_strided_slice %3 {offsets = [0, 0], sizes = [1, 128], strides = [1, 1]} : vector<4x128xf32> to vector<1x128xf32>
    %8 = vector.broadcast %7 : vector<1x128xf32> to vector<8x128xf32>
    %9 = arith.addf %6, %8 : vector<8x128xf32>
    %cst_5 = arith.constant 0.000000e+00 : f32
    %10 = vector.broadcast %cst_5 : f32 to vector<8x128xf32>
    %11 = arith.maximumf %9, %10 : vector<8x128xf32>
    %c16 = arith.constant 16 : index
    %c0_6 = arith.constant 0 : index
    %12 = vector.load %arg2[%c16, %c0_6] : memref<400x128xbf16, #tpu.memory_space<vmem>>, vector<128x128xbf16>
    %13 = arith.truncf %11 : vector<8x128xf32> to vector<8x128xbf16>
    %cst_7 = arith.constant dense<0.000000e+00> : vector<8x128xf32>
    %14 = tpu.matmul %13, %12, %cst_7 {dimension_numbers = #tpu.dot_dimension_numbers<[1], [0], [0], [1], [0, 0, 1, 1], [], []>} : vector<8x128xbf16>, vector<128x128xbf16>, vector<8x128xf32> -> vector<8x128xf32>
    %15 = vector.extract_strided_slice %3 {offsets = [1, 0], sizes = [1, 128], strides = [1, 1]} : vector<4x128xf32> to vector<1x128xf32>
    %16 = vector.broadcast %15 : vector<1x128xf32> to vector<8x128xf32>
    %17 = arith.addf %14, %16 : vector<8x128xf32>
    %cst_8 = arith.constant 0.000000e+00 : f32
    %18 = vector.broadcast %cst_8 : f32 to vector<8x128xf32>
    %19 = arith.maximumf %17, %18 : vector<8x128xf32>
    %c144 = arith.constant 144 : index
    %c0_9 = arith.constant 0 : index
    %20 = vector.load %arg2[%c144, %c0_9] : memref<400x128xbf16, #tpu.memory_space<vmem>>, vector<128x128xbf16>
    %21 = arith.truncf %19 : vector<8x128xf32> to vector<8x128xbf16>
    %cst_10 = arith.constant dense<0.000000e+00> : vector<8x128xf32>
    %22 = tpu.matmul %21, %20, %cst_10 {dimension_numbers = #tpu.dot_dimension_numbers<[1], [0], [0], [1], [0, 0, 1, 1], [], []>} : vector<8x128xbf16>, vector<128x128xbf16>, vector<8x128xf32> -> vector<8x128xf32>
    %23 = vector.extract_strided_slice %3 {offsets = [2, 0], sizes = [1, 128], strides = [1, 1]} : vector<4x128xf32> to vector<1x128xf32>
    %24 = vector.broadcast %23 : vector<1x128xf32> to vector<8x128xf32>
    %25 = arith.addf %22, %24 : vector<8x128xf32>
    %cst_11 = arith.constant 0.000000e+00 : f32
    %26 = vector.broadcast %cst_11 : f32 to vector<8x128xf32>
    %27 = arith.maximumf %25, %26 : vector<8x128xf32>
    %c272 = arith.constant 272 : index
    %c0_12 = arith.constant 0 : index
    %28 = vector.load %arg2[%c272, %c0_12] : memref<400x128xbf16, #tpu.memory_space<vmem>>, vector<128x128xbf16>
    %29 = arith.truncf %27 : vector<8x128xf32> to vector<8x128xbf16>
    %cst_13 = arith.constant dense<0.000000e+00> : vector<8x128xf32>
    %30 = tpu.matmul %29, %28, %cst_13 {dimension_numbers = #tpu.dot_dimension_numbers<[1], [0], [0], [1], [0, 0, 1, 1], [], []>} : vector<8x128xbf16>, vector<128x128xbf16>, vector<8x128xf32> -> vector<8x128xf32>
    %31 = vector.extract_strided_slice %3 {offsets = [3, 0], sizes = [1, 128], strides = [1, 1]} : vector<4x128xf32> to vector<1x128xf32>
    %32 = vector.broadcast %31 : vector<1x128xf32> to vector<8x128xf32>
    %33 = arith.addf %30, %32 : vector<8x128xf32>
    %cst_14 = arith.constant 9.99999996E-13 : f32
    %34 = vector.broadcast %cst_14 : f32 to vector<8x4xf32>
    %35 = arith.maximumf %2, %34 : vector<8x4xf32>
    %cst_15 = arith.constant 0.99999988 : f32
    %36 = vector.broadcast %cst_15 : f32 to vector<8x4xf32>
    %37 = arith.minimumf %35, %36 : vector<8x4xf32>
    %38 = vector.extract_strided_slice %33 {offsets = [0, 0], sizes = [8, 4], strides = [1, 1]} : vector<8x128xf32> to vector<8x4xf32>
    %39 = math.log %37 : vector<8x4xf32>
    %cst_16 = arith.constant 0.000000e+00 : f32
    %40 = vector.broadcast %cst_16 : f32 to vector<8x4xf32>
    %41 = arith.subf %40, %39 : vector<8x4xf32>
    %42 = math.log %41 : vector<8x4xf32>
    %cst_17 = arith.constant 0.000000e+00 : f32
    %43 = vector.broadcast %cst_17 : f32 to vector<8x4xf32>
    %44 = arith.subf %43, %42 : vector<8x4xf32>
    %45 = arith.addf %38, %44 : vector<8x4xf32>
    %cst_18 = arith.constant dense<0xFF800000> : vector<8xf32>
    %46 = vector.multi_reduction <maximumf>, %45, %cst_18 [1] : vector<8x4xf32> to vector<8xf32>
    %47 = vector.shape_cast %46 : vector<8xf32> to vector<8x1xf32>
    %48 = tpu.iota {dimensions = array<i32: 1>} : vector<8x4xi32>
    %49 = vector.broadcast %47 : vector<8x1xf32> to vector<8x4xf32>
    %50 = arith.cmpf oeq, %45, %49 : vector<8x4xf32>
    %c4_i32 = arith.constant 4 : i32
    %51 = vector.broadcast %c4_i32 : i32 to vector<8x4xi32>
    %52 = arith.select %50, %48, %51 : vector<8x4xi1>, vector<8x4xi32>
    %cst_19 = arith.constant dense<2147483647> : vector<8xi32>
    %53 = vector.multi_reduction <minsi>, %52, %cst_19 [1] : vector<8x4xi32> to vector<8xi32>
    %54 = vector.shape_cast %53 : vector<8xi32> to vector<8x1xi32>
    %55 = arith.sitofp %54 : vector<8x1xi32> to vector<8x1xf32>
    %56 = vector.shape_cast %55 : vector<8x1xf32> to vector<8x1xf32>
    %57 = vector.broadcast %56 : vector<8x1xf32> to vector<8x128xf32>
    %58 = tpu.concatenate %11, %33, %57 in 1 : vector<8x128xf32>, vector<8x128xf32>, vector<8x128xf32> -> vector<8x384xf32>
    %c0_20 = arith.constant 0 : index
    %c0_21 = arith.constant 0 : index
    %59 = vector.load %arg4[%c0_20, %c0_21] : memref<8x384xf32, #tpu.memory_space<vmem>>, vector<8x384xf32>
    tpu.vector_store %arg4[%c0_20, %c0_21], %58 {strides = array<i32>} : memref<8x384xf32, #tpu.memory_space<vmem>>, vector<8x384xf32>,
    return
  }
  func.func @transform_0(%arg0: i32) -> (i32, i32) {
    %c0_i32 = arith.constant 0 : i32
    %c0_i32_0 = arith.constant 0 : i32
    return %arg0, %c0_i32 : i32, i32
  }
  func.func @transform_1(%arg0: i32) -> (i32, i32) {
    %c0_i32 = arith.constant 0 : i32
    %c0_i32_0 = arith.constant 0 : i32
    %c0_i32_1 = arith.constant 0 : i32
    return %c0_i32, %c0_i32_0 : i32, i32
  }
  func.func @transform_2(%arg0: i32) -> (i32, i32) {
    %c0_i32 = arith.constant 0 : i32
    %c0_i32_0 = arith.constant 0 : i32
    %c0_i32_1 = arith.constant 0 : i32
    return %c0_i32, %c0_i32_0 : i32, i32
  }
  func.func @transform_3(%arg0: i32) -> (i32, i32) {
    %c0_i32 = arith.constant 0 : i32
    %c0_i32_0 = arith.constant 0 : i32
    return %arg0, %c0_i32 : i32, i32
  }
}

</mosaic_0001>

<llo_original>
// kernel: tpu_custom_call.1
$region0: #{tpu_custom_call.1}
  #allocation0 [shape = 'u32[]', space=smem, size = 0x4, offset = 0x4, fixed_abs, tag = 'smem constant byte address 0x4 - core index']
  #allocation1 [shape = 'u32[144,128]{1,0:T(1,128)}', space=vmem, size = 0x12000, scoped, tag = 'internal scratch']
  %s0 = inlined_call_operand.hbm [shape: f32[16,32], index: 0, kind: input, shape index: {}]
  %s1 = inlined_call_operand.hbm [shape: bf16[400,128], index: 1, kind: input, shape index: {}]
  %s2 = inlined_call_operand.vmem [shape: f32[4,128], index: 2, kind: input, shape index: {}]
  %s3 = inlined_call_operand.hbm [shape: f32[16,384], index: 3, kind: output, shape index: {}]
  %s4 = sld [smem:[#allocation0]]
  $region53: #{tpu_custom_call.1} parent=0
    _
  %s6 = ssub.s32 1, %s4
  %s7 = scalar_select 0, %s6, %s4
  $region1: #{tpu_custom_call.1} parent=0
    #allocation2 [shape = 'u8[8192]{0}', space=vmem, size = 0x2000, scoped, tag = 'input window, operand 0']
    #allocation3 [shape = 's32[2]{0}', space=sflag, size = 0x8, scoped, tag = 'scoped memory for tpu_custom_call.1']
    #allocation4 [shape = 's32[2]{0}', space=sflag, size = 0x8, scoped, tag = 'scoped memory for tpu_custom_call.1']
    #allocation5 [shape = 'u8[102400]{0}', space=vmem, size = 0x19000, scoped, tag = 'input window, operand 1, single buffered']
    #allocation6 [shape = 's32[1]{0}', space=sflag, size = 0x4, scoped, tag = 'scoped memory for tpu_custom_call.1']
    #allocation7 [shape = 'u8[24576]{0}', space=vmem, size = 0x6000, scoped, tag = 'output window, operand 0']
    %8 = vsyncpa [#allocation3], 0
    %s9 = scalar_lea.sflag [#allocation3], 1
    %10 = vsyncpa %s9, 0
    %11 = vsyncpa [#allocation6], 0
    %12 = vsyncpa [#allocation4], 0
    %s13 = scalar_lea.sflag [#allocation4], 1
    %14 = vsyncpa %s13, 0
    loop: start=0, step=1, limit=4
    $region2: #{tpu_custom_call.1} parent=1 // loop_pre_header
      _
    $region3: #{tpu_custom_call.1} parent=1 // loop_header
      %s16 = sphi 0, %s20
      %p17 = scmp.ge.s32.totalorder %s16, 4
      %s26 = sphi 0, %s28
      %s29 = sphi 0, %s26
      %s30 = sphi 0, %s29
      %s46 = sphi 0, %s30
      %s50 = sphi 0, %s50
      %s52 = sphi 0, %s50
      %s53 = sphi 0, %s52
      %s67 = sphi 0, %s53
      %s71 = sphi 0, %s71
      %s73 = sphi 0, %s71
      %s74 = sphi 0, %s73
      %s88 = sphi 0, %s74
      %s94 = sphi 0, %s96
      %s97 = sphi 0, %s94
      %s98 = sphi 0, %s97
      %s114 = sphi 0, %s98
    $region4: #{tpu_custom_call.1} parent=1 // loop_header_branch
      %19 = sbr.rel (%p17) target = $region8
    $region5: #{tpu_custom_call.1} parent=1 // loop_body
      %s21 = ssub.s32 %s16, 1
      %s22 = ssub.s32 %s16, 2
      %s23 = sadd.s32 %s16, 1
      %s24 = ssub.s32 %s16, %s23
      %p25 = scmp.eq.s32.totalorder %s24, 0
      %s27 = sadd.s32 %s26, 1
      %s28 = scalar_select %p25, %s26, %s27
      %p31 = pneg %p25
      %p32 = scmp.eq.s32.totalorder %s16, 1
      %p33 = por %p31, %p32
      %p34 = scmp.ne.s32.totalorder %s26, %s29
      %p35 = scmp.eq.s32.totalorder %s16, 0
      %p36 = por %p34, %p35
      %p37 = scmp.ne.s32.totalorder %s26, %s29
      %p38 = scmp.eq.s32.totalorder %s21, 1
      %p39 = por %p37, %p38
      %p40 = scmp.ne.s32.totalorder %s29, %s30
      %p41 = scmp.eq.s32.totalorder %s21, 0
      %p42 = por %p40, %p41
      %p43 = scmp.ne.s32.totalorder %s29, %s30
      %p44 = scmp.eq.s32.totalorder %s22, 1
      %p45 = por %p43, %p44
      %p47 = scmp.ne.s32.totalorder %s30, %s46
      %p48 = scmp.eq.s32.totalorder %s22, 0
      %p49 = por %p47, %p48
      %s51 = sadd.s32 %s50, 1
      %p54 = scmp.eq.s32.totalorder %s16, 1
      %p55 = scmp.ne.s32.totalorder %s50, %s52
      %p56 = scmp.eq.s32.totalorder %s16, 0
      %p57 = por %p55, %p56
      %p58 = scmp.ne.s32.totalorder %s50, %s52
      %p59 = scmp.eq.s32.totalorder %s21, 1
      %p60 = por %p58, %p59
      %p61 = scmp.ne.s32.totalorder %s52, %s53
      %p62 = scmp.eq.s32.totalorder %s21, 0
      %p63 = por %p61, %p62
      %p64 = scmp.ne.s32.totalorder %s52, %s53
      %p65 = scmp.eq.s32.totalorder %s22, 1
      %p66 = por %p64, %p65
      %p68 = scmp.ne.s32.totalorder %s53, %s67
      %p69 = scmp.eq.s32.totalorder %s22, 0
      %p70 = por %p68, %p69
      %s72 = sadd.s32 %s71, 1
      %p75 = scmp.eq.s32.totalorder %s16, 1
      %p76 = scmp.ne.s32.totalorder %s71, %s73
      %p77 = scmp.eq.s32.totalorder %s16, 0
      %p78 = por %p76, %p77
      %p79 = scmp.ne.s32.totalorder %s71, %s73
      %p80 = scmp.eq.s32.totalorder %s21, 1
      %p81 = por %p79, %p80
      %p82 = scmp.ne.s32.totalorder %s73, %s74
      %p83 = scmp.eq.s32.totalorder %s21, 0
      %p84 = por %p82, %p83
      %p85 = scmp.ne.s32.totalorder %s73, %s74
      %p86 = scmp.eq.s32.totalorder %s22, 1
      %p87 = por %p85, %p86
      %p89 = scmp.ne.s32.totalorder %s74, %s88
      %p90 = scmp.eq.s32.totalorder %s22, 0
      %p91 = por %p89, %p90
      %s92 = ssub.s32 %s16, %s23
      %p93 = scmp.eq.s32.totalorder %s92, 0
      %s95 = sadd.s32 %s94, 1
      %s96 = scalar_select %p93, %s94, %s95
      %p99 = pneg %p93
      %p100 = scmp.eq.s32.totalorder %s16, 1
      %p101 = por %p99, %p100
      %p102 = scmp.ne.s32.totalorder %s94, %s97
      %p103 = scmp.eq.s32.totalorder %s16, 0
      %p104 = por %p102, %p103
      %p105 = scmp.ne.s32.totalorder %s94, %s97
      %p106 = scmp.eq.s32.totalorder %s21, 1
      %p107 = por %p105, %p106
      %p108 = scmp.ne.s32.totalorder %s97, %s98
      %p109 = scmp.eq.s32.totalorder %s21, 0
      %p110 = por %p108, %p109
      %p111 = scmp.ne.s32.totalorder %s97, %s98
      %p112 = scmp.eq.s32.totalorder %s22, 1
      %p113 = por %p111, %p112
      %p115 = scmp.ne.s32.totalorder %s98, %s114
      %p116 = scmp.eq.s32.totalorder %s22, 0
      %p117 = por %p115, %p116
      %p118 = scmp.le.s32.totalorder 1, %s16
      %p119 = scmp.lt.s32.totalorder %s16, 3
      %p120 = pnand %p118, %p119
      %p121 = pneg %p120
      // Predicated region
      $region9: #{tpu_custom_call.1} parent=5 // pred_check
        _
      $region10: #{tpu_custom_call.1} parent=5 // pred_check_branch
        %123 = sbr.rel (%p120) target = $region12
      $region11: #{tpu_custom_call.1} parent=5 // pred_region
        %s124 = ssub.s32 %s16, 1
        // Predicated region
        $region13: #{tpu_custom_call.1} parent=11 // pred_check
          %p125 = pneg %p63
        $region14: #{tpu_custom_call.1} parent=11 // pred_check_branch
          %127 = sbr.rel (%p125) target = $region16
        $region15: #{tpu_custom_call.1} parent=11 // pred_region
          %s129 = ssub.s32 3200, 3200
          %130 = vsyncadd [#allocation6], %s129
          %s131 = sshll.u32 [#allocation5], 4
          %s132 = int_to_ptr.vmem [resolvable:$true] %s131
          %137 = dma.hbm_to_vmem [thread:$0]  %s1, 3200, %s132, [#allocation6], 64, 64, 4
        $region16: #{tpu_custom_call.1} parent=11 // pred_fallthru
          _
        // Predicated region
        $region17: #{tpu_custom_call.1} parent=11 // pred_check
          %p138 = pneg %p84
        $region18: #{tpu_custom_call.1} parent=11 // pred_check_branch
          %140 = sbr.rel (%p138) target = $region20
        $region19: #{tpu_custom_call.1} parent=11 // pred_region
          _
        $region20: #{tpu_custom_call.1} parent=11 // pred_fallthru
          _
      $region12: #{tpu_custom_call.1} parent=5 // pred_fallthru
        _
      %p141 = scmp.lt.s32.totalorder %s16, 2
      // Predicated region
      $region21: #{tpu_custom_call.1} parent=5 // pred_check
        %p142 = pneg %p141
      $region22: #{tpu_custom_call.1} parent=5 // pred_check_branch
        %144 = sbr.rel (%p142) target = $region24
      $region23: #{tpu_custom_call.1} parent=5 // pred_region
        // Predicated region
        $region25: #{tpu_custom_call.1} parent=23 // pred_check
          %p145 = pneg %p36
        $region26: #{tpu_custom_call.1} parent=23 // pred_check_branch
          %147 = sbr.rel (%p145) target = $region28
        $region27: #{tpu_custom_call.1} parent=23 // pred_region
          %s148 = sand.u32 %s26, 1
          %s149 = scalar_lea.sflag [#allocation3], %s148
          %s150 = sand.u32 %s26, 1
          %s151 = smul.addr %s150, 8
          %s152 = scalar_lea.vmem [#allocation2], %s151
          %s154 = ssub.s32 128, 128
          %155 = vsyncadd %s149, %s154
          %s156 = smul.addr %s16, 128
          %s157 = scalar_lea.hbm %s0, %s156
          %s159 = sshll.u32 %s152, 4
          %s160 = int_to_ptr.vmem [resolvable:$true] %s159
          %162 = dma.hbm_to_vmem [thread:$0]  %s157, 128, %s160, %s149
        $region28: #{tpu_custom_call.1} parent=23 // pred_fallthru
          _
      $region24: #{tpu_custom_call.1} parent=5 // pred_fallthru
        _
      %p163 = scmp.le.s32.totalorder 1, %s16
      %p164 = scmp.lt.s32.totalorder %s16, 3
      %p165 = pnand %p163, %p164
      %p166 = pneg %p165
      // Predicated region
      $region29: #{tpu_custom_call.1} parent=5 // pred_check
        _
      $region30: #{tpu_custom_call.1} parent=5 // pred_check_branch
        %168 = sbr.rel (%p165) target = $region32
      $region31: #{tpu_custom_call.1} parent=5 // pred_region
        %s169 = ssub.s32 %s16, 1
        %s170 = sand.u32 %s29, 1
        %s171 = scalar_lea.sflag [#allocation3], %s170
        %s172 = sand.u32 %s29, 1
        %s173 = smul.addr %s172, 8
        %s174 = scalar_lea.vmem [#allocation2], %s173
        // Predicated region
        $region33: #{tpu_custom_call.1} parent=31 // pred_check
          %p175 = pneg %p42
        $region34: #{tpu_custom_call.1} parent=31 // pred_check_branch
          %177 = sbr.rel (%p175) target = $region36
        $region35: #{tpu_custom_call.1} parent=31 // pred_region
          %178 = dma.done %s171, 128
        $region36: #{tpu_custom_call.1} parent=31 // pred_fallthru
          _
        // Predicated region
        $region37: #{tpu_custom_call.1} parent=31 // pred_check
          %p179 = pneg %p63
        $region38: #{tpu_custom_call.1} parent=31 // pred_check_branch
          %181 = sbr.rel (%p179) target = $region40
        $region39: #{tpu_custom_call.1} parent=31 // pred_region
          %182 = dma.done [#allocation6], 3200
        $region40: #{tpu_custom_call.1} parent=31 // pred_fallthru
          _
        %s183 = sand.u32 %s29, 1
        %s184 = scalar_lea.sflag [#allocation3], %s183
        %s185 = sand.u32 %s29, 1
        %s186 = smul.addr %s185, 8
        %s187 = scalar_lea.vmem [#allocation2], %s186
        %p188 = pneg %p42
        %p189 = pneg %p39
        %p190 = pneg %p63
        %p191 = pneg %p60
        %p192 = pneg %p84
        %p193 = pneg %p81
        %p194 = pneg %p110
        %p195 = pneg %p107
        %s196 = sand.u32 %s97, 1
        %s197 = scalar_lea.sflag [#allocation4], %s196
        %s198 = sand.u32 %s97, 1
        %s199 = smul.addr %s198, 24
        %s200 = scalar_lea.vmem [#allocation7], %s199
        %v202 = vld [vmem:[%s174] sm:$0xff]
        %v203 = vld [vmem:[%s2] sm:$0xf]
        %v204 = vld [vmem:[#allocation5] sm:$0xf]
        %v205 = vld [vmem:[#allocation5 + $0x4] sm:$0xf]
        %v206 = vpack.c.bf16 %v202, %v202
        %v207 = vlaneseq
        %v208 = vshrl.u32 %v207, 7
        %v209 = vsub.s32 0, %v208
        %v210 = vrot.slane %v203, %v209
        %v213 = vunpack.c.l.b16 %v204
        %v214 = vunpack.c.l.b16 %v205
        %v215 = vpack.c.b16 %v214, %v213
        %vm217 = vcmask 130048
        %v219 = vsel %vm217, %v206, 0
        %221 = vmatprep.subr.bf16.mxu0 0
        %222 = vmatpush1.bf16.msra.mxu0 %v215
        %223 = vmatprep.subr.bf16.mxu0 0
        %224 = vmatpush1.bf16.msra.mxu0 0
        %225 = vmatprep.subr.bf16.mxu0 0
        %226 = vmatpush1.bf16.msra.mxu0 0
        %227 = vmatprep.subr.bf16.mxu0 0
        %228 = vmatpush1.bf16.msra.mxu0 0
        %229 = vmatprep.subr.bf16.mxu0 0
        %230 = vmatpush1.bf16.msra.mxu0 0
        %231 = vmatprep.subr.bf16.mxu0 0
        %232 = vmatpush1.bf16.msra.mxu0 0
        %233 = vmatprep.subr.bf16.mxu0 0
        %234 = vmatpush1.bf16.msra.mxu0 0
        %235 = vmatprep.subr.bf16.mxu0 0
        %236 = vmatpush1.bf16.msra.mxu0 0
        %237 = vmatprep.subr.bf16.mxu0 0
        %238 = vmatpush1.bf16.msra.mxu0 0
        %239 = vmatprep.subr.bf16.mxu0 0
        %240 = vmatpush1.bf16.msra.mxu0 0
        %241 = vmatprep.subr.bf16.mxu0 0
        %242 = vmatpush1.bf16.msra.mxu0 0
        %243 = vmatprep.subr.bf16.mxu0 0
        %244 = vmatpush1.bf16.msra.mxu0 0
        %245 = vmatprep.subr.bf16.mxu0 0
        %246 = vmatpush1.bf16.msra.mxu0 0
        %247 = vmatprep.subr.bf16.mxu0 0
        %248 = vmatpush1.bf16.msra.mxu0 0
        %249 = vmatprep.subr.bf16.mxu0 0
        %250 = vmatpush1.bf16.msra.mxu0 0
        %251 = vmatprep.subr.bf16.mxu0 0
        %252 = vmatpush1.bf16.msra.mxu0 0
        %253 = vmatprep.mubr.bf16.mxu0 0
        %254 = vmatmul.mubr.bf16.gmra.mrb[0].mxu0 %v219
        %v255 = vpop.f32.mrb[0].mxu0
        %v256 = vadd.f32 %v210, %v255
        %v257 = vpop.f32.mrb[0].mxu0
        %v258 = vpop.f32.mrb[0].mxu0
        %v259 = vpop.f32.mrb[0].mxu0
        %260 = vdwg.mxu0
        %v261 = vmax.f32 %v256, 0.0
        %v262 = vld [vmem:[#allocation5 + $0x8] sm:$0xf]
        %v263 = vld [vmem:[#allocation5 + $0xc] sm:$0xf]
        %v264 = vld [vmem:[#allocation5 + $0x10] sm:$0xf]
        %v265 = vld [vmem:[#allocation5 + $0x14] sm:$0xf]
        %v266 = vld [vmem:[#allocation5 + $0x18] sm:$0xf]
        %v267 = vld [vmem:[#allocation5 + $0x1c] sm:$0xf]
        %v268 = vld [vmem:[#allocation5 + $0x20] sm:$0xf]
        %v269 = vld [vmem:[#allocation5 + $0x24] sm:$0xf]
        %v270 = vld [vmem:[#allocation5 + $0x28] sm:$0xf]
        %v271 = vld [vmem:[#allocation5 + $0x2c] sm:$0xf]
        %v272 = vld [vmem:[#allocation5 + $0x30] sm:$0xf]
        %v273 = vld [vmem:[#allocation5 + $0x34] sm:$0xf]
        %v274 = vld [vmem:[#allocation5 + $0x38] sm:$0xf]
        %v275 = vld [vmem:[#allocation5 + $0x3c] sm:$0xf]
        %v276 = vld [vmem:[#allocation5 + $0x40] sm:$0xf]
        %v277 = vld [vmem:[#allocation5 + $0x44] sm:$0xf]
        %v278 = vpack.c.bf16 %v261, %v261
        %v279 = vlaneseq
        %v280 = vshrl.u32 %v279, 7
        %v281 = vsub.s32 1, %v280
        %v282 = vrot.slane %v203, %v281
        %v299 = vunpack.c.l.b16 %v262
        %v300 = vunpack.c.l.b16 %v263
        %v301 = vunpack.c.l.b16 %v264
        %v302 = vunpack.c.l.b16 %v265
        %v303 = vunpack.c.l.b16 %v266
        %v304 = vunpack.c.l.b16 %v267
        %v305 = vunpack.c.l.b16 %v268
        %v306 = vunpack.c.l.b16 %v269
        %v307 = vunpack.c.l.b16 %v270
        %v308 = vunpack.c.l.b16 %v271
        %v309 = vunpack.c.l.b16 %v272
        %v310 = vunpack.c.l.b16 %v273
        %v311 = vunpack.c.l.b16 %v274
        %v312 = vunpack.c.l.b16 %v275
        %v313 = vunpack.c.l.b16 %v276
        %v314 = vunpack.c.l.b16 %v277
        %v315 = vpack.c.b16 %v300, %v299
        %v316 = vpack.c.b16 %v302, %v301
        %v317 = vpack.c.b16 %v304, %v303
        %v318 = vpack.c.b16 %v306, %v305
        %v319 = vpack.c.b16 %v308, %v307
        %v320 = vpack.c.b16 %v310, %v309
        %v321 = vpack.c.b16 %v312, %v311
        %v322 = vpack.c.b16 %v314, %v313
        %331 = vmatprep.subr.bf16.mxu0 0
        %332 = vmatpush1.bf16.msra.mxu0 %v315
        %333 = vmatprep.subr.bf16.mxu0 0
        %334 = vmatpush1.bf16.msra.mxu0 %v316
        %335 = vmatprep.subr.bf16.mxu0 0
        %336 = vmatpush1.bf16.msra.mxu0 %v317
        %337 = vmatprep.subr.bf16.mxu0 0
        %338 = vmatpush1.bf16.msra.mxu0 %v318
        %339 = vmatprep.subr.bf16.mxu0 0
        %340 = vmatpush1.bf16.msra.mxu0 %v319
        %341 = vmatprep.subr.bf16.mxu0 0
        %342 = vmatpush1.bf16.msra.mxu0 %v320
        %343 = vmatprep.subr.bf16.mxu0 0
        %344 = vmatpush1.bf16.msra.mxu0 %v321
        %345 = vmatprep.subr.bf16.mxu0 0
        %346 = vmatpush1.bf16.msra.mxu0 %v322
        %347 = vmatprep.subr.bf16.mxu0 0
        %348 = vmatpush1.bf16.msra.mxu0 0
        %349 = vmatprep.subr.bf16.mxu0 0
        %350 = vmatpush1.bf16.msra.mxu0 0
        %351 = vmatprep.subr.bf16.mxu0 0
        %352 = vmatpush1.bf16.msra.mxu0 0
        %353 = vmatprep.subr.bf16.mxu0 0
        %354 = vmatpush1.bf16.msra.mxu0 0
        %355 = vmatprep.subr.bf16.mxu0 0
        %356 = vmatpush1.bf16.msra.mxu0 0
        %357 = vmatprep.subr.bf16.mxu0 0
        %358 = vmatpush1.bf16.msra.mxu0 0
        %359 = vmatprep.subr.bf16.mxu0 0
        %360 = vmatpush1.bf16.msra.mxu0 0
        %361 = vmatprep.subr.bf16.mxu0 0
        %362 = vmatpush1.bf16.msra.mxu0 0
        %363 = vmatprep.mubr.bf16.mxu0 0
        %364 = vmatmul.mubr.bf16.gmra.mrb[0].mxu0 %v278
        %v365 = vpop.f32.mrb[0].mxu0
        %v366 = vadd.f32 %v282, %v365
        %v367 = vpop.f32.mrb[0].mxu0
        %v368 = vpop.f32.mrb[0].mxu0
        %v369 = vpop.f32.mrb[0].mxu0
        %370 = vdwg.mxu0
        %v371 = vmax.f32 %v366, 0.0
        %v372 = vld [vmem:[#allocation5 + $0x48] sm:$0xf]
        %v373 = vld [vmem:[#allocation5 + $0x4c] sm:$0xf]
        %v374 = vld [vmem:[#allocation5 + $0x50] sm:$0xf]
        %v375 = vld [vmem:[#allocation5 + $0x54] sm:$0xf]
        %v376 = vld [vmem:[#allocation5 + $0x58] sm:$0xf]
        %v377 = vld [vmem:[#allocation5 + $0x5c] sm:$0xf]
        %v378 = vld [vmem:[#allocation5 + $0x60] sm:$0xf]
        %v379 = vld [vmem:[#allocation5 + $0x64] sm:$0xf]
        %v380 = vld [vmem:[#allocation5 + $0x68] sm:$0xf]
        %v381 = vld [vmem:[#allocation5 + $0x6c] sm:$0xf]
        %v382 = vld [vmem:[#allocation5 + $0x70] sm:$0xf]
        %v383 = vld [vmem:[#allocation5 + $0x74] sm:$0xf]
        %v384 = vld [vmem:[#allocation5 + $0x78] sm:$0xf]
        %v385 = vld [vmem:[#allocation5 + $0x7c] sm:$0xf]
        %v386 = vld [vmem:[#allocation5 + $0x80] sm:$0xf]
        %v387 = vld [vmem:[#allocation5 + $0x84] sm:$0xf]
        %v388 = vpack.c.bf16 %v371, %v371
        %v389 = vlaneseq
        %v390 = vshrl.u32 %v389, 7
        %v391 = vsub.s32 2, %v390
        %v392 = vrot.slane %v203, %v391
        %v409 = vunpack.c.l.b16 %v372
        %v410 = vunpack.c.l.b16 %v373
        %v411 = vunpack.c.l.b16 %v374
        %v412 = vunpack.c.l.b16 %v375
        %v413 = vunpack.c.l.b16 %v376
        %v414 = vunpack.c.l.b16 %v377
        %v415 = vunpack.c.l.b16 %v378
        %v416 = vunpack.c.l.b16 %v379
        %v417 = vunpack.c.l.b16 %v380
        %v418 = vunpack.c.l.b16 %v381
        %v419 = vunpack.c.l.b16 %v382
        %v420 = vunpack.c.l.b16 %v383
        %v421 = vunpack.c.l.b16 %v384
        %v422 = vunpack.c.l.b16 %v385
        %v423 = vunpack.c.l.b16 %v386
        %v424 = vunpack.c.l.b16 %v387
        %v425 = vpack.c.b16 %v410, %v409
        %v426 = vpack.c.b16 %v412, %v411
        %v427 = vpack.c.b16 %v414, %v413
        %v428 = vpack.c.b16 %v416, %v415
        %v429 = vpack.c.b16 %v418, %v417
        %v430 = vpack.c.b16 %v420, %v419
        %v431 = vpack.c.b16 %v422, %v421
        %v432 = vpack.c.b16 %v424, %v423
        %441 = vmatprep.subr.bf16.mxu0 0
        %442 = vmatpush1.bf16.msra.mxu0 %v425
        %443 = vmatprep.subr.bf16.mxu0 0
        %444 = vmatpush1.bf16.msra.mxu0 %v426
        %445 = vmatprep.subr.bf16.mxu0 0
        %446 = vmatpush1.bf16.msra.mxu0 %v427
        %447 = vmatprep.subr.bf16.mxu0 0
        %448 = vmatpush1.bf16.msra.mxu0 %v428
        %449 = vmatprep.subr.bf16.mxu0 0
        %450 = vmatpush1.bf16.msra.mxu0 %v429
        %451 = vmatprep.subr.bf16.mxu0 0
        %452 = vmatpush1.bf16.msra.mxu0 %v430
        %453 = vmatprep.subr.bf16.mxu0 0
        %454 = vmatpush1.bf16.msra.mxu0 %v431
        %455 = vmatprep.subr.bf16.mxu0 0
        %456 = vmatpush1.bf16.msra.mxu0 %v432
        %457 = vmatprep.subr.bf16.mxu0 0
        %458 = vmatpush1.bf16.msra.mxu0 0
        %459 = vmatprep.subr.bf16.mxu0 0
        %460 = vmatpush1.bf16.msra.mxu0 0
        %461 = vmatprep.subr.bf16.mxu0 0
        %462 = vmatpush1.bf16.msra.mxu0 0
        %463 = vmatprep.subr.bf16.mxu0 0
        %464 = vmatpush1.bf16.msra.mxu0 0
        %465 = vmatprep.subr.bf16.mxu0 0
        %466 = vmatpush1.bf16.msra.mxu0 0
        %467 = vmatprep.subr.bf16.mxu0 0
        %468 = vmatpush1.bf16.msra.mxu0 0
        %469 = vmatprep.subr.bf16.mxu0 0
        %470 = vmatpush1.bf16.msra.mxu0 0
        %471 = vmatprep.subr.bf16.mxu0 0
        %472 = vmatpush1.bf16.msra.mxu0 0
        %473 = vmatprep.mubr.bf16.mxu0 0
        %474 = vmatmul.mubr.bf16.gmra.mrb[0].mxu0 %v388
        %v475 = vpop.f32.mrb[0].mxu0
        %v476 = vadd.f32 %v392, %v475
        %v477 = vpop.f32.mrb[0].mxu0
        %v478 = vpop.f32.mrb[0].mxu0
        %v479 = vpop.f32.mrb[0].mxu0
        %480 = vdwg.mxu0
        %v481 = vmax.f32 %v476, 0.0
        %v482 = vld [vmem:[#allocation5 + $0x88] sm:$0xf]
        %v483 = vld [vmem:[#allocation5 + $0x8c] sm:$0xf]
        %v484 = vld [vmem:[#allocation5 + $0x90] sm:$0xf]
        %v485 = vld [vmem:[#allocation5 + $0x94] sm:$0xf]
        %v486 = vld [vmem:[#allocation5 + $0x98] sm:$0xf]
        %v487 = vld [vmem:[#allocation5 + $0x9c] sm:$0xf]
        %v488 = vld [vmem:[#allocation5 + $0xa0] sm:$0xf]
        %v489 = vld [vmem:[#allocation5 + $0xa4] sm:$0xf]
        %v490 = vld [vmem:[#allocation5 + $0xa8] sm:$0xf]
        %v491 = vld [vmem:[#allocation5 + $0xac] sm:$0xf]
        %v492 = vld [vmem:[#allocation5 + $0xb0] sm:$0xf]
        %v493 = vld [vmem:[#allocation5 + $0xb4] sm:$0xf]
        %v494 = vld [vmem:[#allocation5 + $0xb8] sm:$0xf]
        %v495 = vld [vmem:[#allocation5 + $0xbc] sm:$0xf]
        %v496 = vld [vmem:[#allocation5 + $0xc0] sm:$0xf]
        %v497 = vld [vmem:[#allocation5 + $0xc4] sm:$0xf]
        %v498 = vpack.c.bf16 %v481, %v481
        %v499 = vlaneseq
        %v500 = vshrl.u32 %v499, 7
        %v501 = vsub.s32 3, %v500
        %v502 = vrot.slane %v203, %v501
        %v519 = vunpack.c.l.b16 %v482
        %v520 = vunpack.c.l.b16 %v483
        %v521 = vunpack.c.l.b16 %v484
        %v522 = vunpack.c.l.b16 %v485
        %v523 = vunpack.c.l.b16 %v486
        %v524 = vunpack.c.l.b16 %v487
        %v525 = vunpack.c.l.b16 %v488
        %v526 = vunpack.c.l.b16 %v489
        %v527 = vunpack.c.l.b16 %v490
        %v528 = vunpack.c.l.b16 %v491
        %v529 = vunpack.c.l.b16 %v492
        %v530 = vunpack.c.l.b16 %v493
        %v531 = vunpack.c.l.b16 %v494
        %v532 = vunpack.c.l.b16 %v495
        %v533 = vunpack.c.l.b16 %v496
        %v534 = vunpack.c.l.b16 %v497
        %v535 = vpack.c.b16 %v520, %v519
        %v536 = vpack.c.b16 %v522, %v521
        %v537 = vpack.c.b16 %v524, %v523
        %v538 = vpack.c.b16 %v526, %v525
        %v539 = vpack.c.b16 %v528, %v527
        %v540 = vpack.c.b16 %v530, %v529
        %v541 = vpack.c.b16 %v532, %v531
        %v542 = vpack.c.b16 %v534, %v533
        %551 = vmatprep.subr.bf16.mxu0 0
        %552 = vmatpush1.bf16.msra.mxu0 %v535
        %553 = vmatprep.subr.bf16.mxu0 0
        %554 = vmatpush1.bf16.msra.mxu0 %v536
        %555 = vmatprep.subr.bf16.mxu0 0
        %556 = vmatpush1.bf16.msra.mxu0 %v537
        %557 = vmatprep.subr.bf16.mxu0 0
        %558 = vmatpush1.bf16.msra.mxu0 %v538
        %559 = vmatprep.subr.bf16.mxu0 0
        %560 = vmatpush1.bf16.msra.mxu0 %v539
        %561 = vmatprep.subr.bf16.mxu0 0
        %562 = vmatpush1.bf16.msra.mxu0 %v540
        %563 = vmatprep.subr.bf16.mxu0 0
        %564 = vmatpush1.bf16.msra.mxu0 %v541
        %565 = vmatprep.subr.bf16.mxu0 0
        %566 = vmatpush1.bf16.msra.mxu0 %v542
        %567 = vmatprep.subr.bf16.mxu0 0
        %568 = vmatpush1.bf16.msra.mxu0 0
        %569 = vmatprep.subr.bf16.mxu0 0
        %570 = vmatpush1.bf16.msra.mxu0 0
        %571 = vmatprep.subr.bf16.mxu0 0
        %572 = vmatpush1.bf16.msra.mxu0 0
        %573 = vmatprep.subr.bf16.mxu0 0
        %574 = vmatpush1.bf16.msra.mxu0 0
        %575 = vmatprep.subr.bf16.mxu0 0
        %576 = vmatpush1.bf16.msra.mxu0 0
        %577 = vmatprep.subr.bf16.mxu0 0
        %578 = vmatpush1.bf16.msra.mxu0 0
        %579 = vmatprep.subr.bf16.mxu0 0
        %580 = vmatpush1.bf16.msra.mxu0 0
        %581 = vmatprep.subr.bf16.mxu0 0
        %582 = vmatpush1.bf16.msra.mxu0 0
        %583 = vmatprep.mubr.bf16.mxu0 0
        %584 = vmatmul.mubr.bf16.gmra.mrb[0].mxu0 %v498
        %v585 = vpop.f32.mrb[0].mxu0
        %v586 = vadd.f32 %v502, %v585
        %v587 = vpop.f32.mrb[0].mxu0
        %v588 = vpop.f32.mrb[0].mxu0
        %v589 = vpop.f32.mrb[0].mxu0
        %590 = vdwg.mxu0
        %v591 = vmax.f32 %v202, 1e-12
        %v592 = vmin.f32 %v591, 0.9999999
        %v593 = vlog2.pop %v592
        %v594 = vmul.f32 %v593, 0.6931472
        %v595 = vsub.f32 0.0, %v594
        %v596 = vlog2.pop %v595
        %v597 = vmul.f32 %v596, 0.6931472
        %v598 = vsub.f32 0.0, %v597
        %600 = vrot.lane.b32.xlu0 %v598, 112
        %v601 = vpop.permute.xlu0 %600
        %v603 = vadd.f32 %v586, %v601
        %vm604 = vcmask 31744
        %v605 = vsel %vm604, %v603, -inf
        %606 = vmax.xlane.f32.xlu0 %v605
        %v607 = vpop.xlane.xlu0 %606
        %v608 = vlaneseq
        %v609 = vand.u32 %v608, 127
        %vm610 = vcmp.eq.f32.partialorder %v603, %v607
        %v611 = vsel %vm610, %v609, 4
        %v612 = vsel %vm604, %v611, 2147483647
        %v613 = vand.u32 %v612, 65535
        %v614 = vshra.s32 %v612, 16
        %v615 = vcvt.s32.f32 %v613
        %v616 = vcvt.s32.f32 %v614
        %617 = vmin.xlane.f32.xlu0 %v616
        %v618 = vpop.xlane.xlu0 %617
        %vm619 = vcmp.eq.f32.partialorder %v616, %v618
        %v620 = vsel %vm619, %v615, inf
        %621 = vmin.xlane.f32.xlu0 %v620
        %v622 = vpop.xlane.xlu0 %621
        %v623 = vcvt.f32.s32 %v622
        %v624 = vcvt.f32.s32 %v618
        %v625 = vshll.u32 %v624, 16
        %v626 = vadd.s32 %v625, %v623
        %v627 = vcvt.s32.f32 %v626
        %628 = vst [vmem:[%s200] sm:$0xff] %v261
        %629 = vst [vmem:[%s200 + $0x8] sm:$0xff] %v586
        %630 = vst [vmem:[%s200 + $0x10] sm:$0xff] %v627
        %s631 = sand.u32 %s97, 1
        %s632 = scalar_lea.sflag [#allocation4], %s631
        %s633 = sand.u32 %s97, 1
        %s634 = smul.addr %s633, 24
        %s635 = scalar_lea.vmem [#allocation7], %s634
        // Predicated region
        $region41: #{tpu_custom_call.1} parent=31 // pred_check
          %p636 = pneg %p107
        $region42: #{tpu_custom_call.1} parent=31 // pred_check_branch
          %638 = sbr.rel (%p636) target = $region44
        $region43: #{tpu_custom_call.1} parent=31 // pred_region
          %s640 = ssub.s32 384, 384
          %641 = vsyncadd %s632, %s640
          %s642 = smul.addr %s21, 3
          %s643 = smul.addr %s642, 128
          %s644 = scalar_lea.hbm %s3, %s643
          %s646 = sshll.u32 %s635, 4
          %s647 = int_to_ptr.vmem [resolvable:$true] %s646
          %649 = dma.vmem_to_hbm [thread:$0]  %s647, 384, %s644, %s632
        $region44: #{tpu_custom_call.1} parent=31 // pred_fallthru
          _
      $region32: #{tpu_custom_call.1} parent=5 // pred_fallthru
        _
      %p650 = scmp.le.s32.totalorder 2, %s16
      // Predicated region
      $region45: #{tpu_custom_call.1} parent=5 // pred_check
        %p651 = pneg %p650
      $region46: #{tpu_custom_call.1} parent=5 // pred_check_branch
        %653 = sbr.rel (%p651) target = $region48
      $region47: #{tpu_custom_call.1} parent=5 // pred_region
        %s654 = ssub.s32 %s16, 2
        // Predicated region
        $region49: #{tpu_custom_call.1} parent=47 // pred_check
          %p655 = pneg %p113
        $region50: #{tpu_custom_call.1} parent=47 // pred_check_branch
          %657 = sbr.rel (%p655) target = $region52
        $region51: #{tpu_custom_call.1} parent=47 // pred_region
          %s658 = sand.u32 %s98, 1
          %s659 = scalar_lea.sflag [#allocation4], %s658
          %s660 = sand.u32 %s98, 1
          %s661 = smul.addr %s660, 24
          %s662 = scalar_lea.vmem [#allocation7], %s661
          %663 = dma.done %s659, 384
        $region52: #{tpu_custom_call.1} parent=47 // pred_fallthru
          _
      $region48: #{tpu_custom_call.1} parent=5 // pred_fallthru
        _
    $region6: #{tpu_custom_call.1} parent=1 // loop_footer
      %s20 = sadd.s32 1, %s16
    $region7: #{tpu_custom_call.1} parent=1 // loop_footer_branch
      %15 = sbr.rel target = $region3
    $region8: #{tpu_custom_call.1} parent=1 // loop_exit
      _
    %664 = vsyncpa [#allocation3], 1
    %s665 = scalar_lea.sflag [#allocation3], 1
    %666 = vsyncpa %s665, 1
    %667 = vsyncpa [#allocation6], 1
    %668 = vsyncpa [#allocation4], 1
    %s669 = scalar_lea.sflag [#allocation4], 1
    %670 = vsyncpa %s669, 1

</llo_original>
